<compile_context>
chip_gen: v7x
topology: tpu7x:2x2x1
jax: 0.10.0
libtpu: 0.0.40
codegen_flags: <defaults>
</compile_context>

<pallas_src>
import functools

import jax
import jax.numpy as jnp
from jax import lax
from jax.experimental import pallas as pl
from jax.experimental.pallas import tpu as pltpu


_UNROLL = 8                                   # manual unroll of row loops
_ENTITY_VMEM_BUDGET = 8 * 1024 * 1024         # entity table residency cutoff
_VMEM_LIMIT_BYTES = 32 * 1024 * 1024          # safe on v5e/v6e/v7x


def _round_up(x, m):
    return ((x + m - 1) // m) * m


def _pnorm_rows(diff, p):
    """(tb, D) differences -> (tb, 1) p-norm along the embedding dim (VPU/XLU)."""
    if p == 1:
        red = jnp.abs(diff)
    elif p == 2:
        red = diff * diff
    else:
        red = jnp.power(jnp.abs(diff), float(p))
    ssum = jnp.sum(red, axis=1, keepdims=True)
    if p == 1:
        return ssum
    if p == 2:
        return jnp.sqrt(ssum)
    return jnp.power(ssum, 1.0 / float(p))


# ----------------------------------------------------------------------------
# Path 1: both tables VMEM-resident, gather = in-VMEM dynamic row reads.
# ----------------------------------------------------------------------------
def _transe_vmem_kernel(h_idx, r_idx, t_idx,       # scalar-prefetch refs (SMEM)
                        ent_ref, rel_ref,          # VMEM-resident tables
                        out_ref,                   # (tb, 1) distance block
                        diff_buf,                  # (tb, D) VMEM scratch
                        *, tb, p):
    base = pl.program_id(0) * tb

    def body(i, c):
        for u in range(_UNROLL):                   # manual x8 unroll
            row = i * _UNROLL + u
            s = base + row
            h = ent_ref[pl.ds(h_idx[s], 1), :]
            r = rel_ref[pl.ds(r_idx[s], 1), :]
            t = ent_ref[pl.ds(t_idx[s], 1), :]
            diff_buf[pl.ds(row, 1), :] = h + r - t
        return c

    lax.fori_loop(0, tb // _UNROLL, body, 0)
    out_ref[...] = _pnorm_rows(diff_buf[...], p).astype(out_ref.dtype)


# ----------------------------------------------------------------------------
# Path 2: entity table in HBM, double-buffered row-DMA gather across the grid;
# relation table VMEM-resident; one byte-accounted wait per gather buffer.
# ----------------------------------------------------------------------------
def _transe_hbm_kernel(h_idx, r_idx, t_idx,        # scalar-prefetch refs (SMEM)
                       ent_hbm, rel_ref,           # HBM entity table, VMEM rels
                       out_ref,                    # (tb, 1) distance block
                       hbuf, tbuf, rbuf, sem,      # gather scratch + DMA sems
                       *, tb, p):
    blk = pl.program_id(0)
    nblk = pl.num_programs(0)
    slot = blk % 2

    def issue(block, slot_):
        base_ = block * tb

        def body(i, c):
            for u in range(_UNROLL):               # manual x8 unroll of issue
                row = i * _UNROLL + u
                s = base_ + row
                pltpu.make_async_copy(
                    ent_hbm.at[pl.ds(h_idx[s], 1), :],
                    hbuf.at[slot_, pl.ds(row, 1), :],
                    sem.at[0, slot_]).start()
                pltpu.make_async_copy(
                    ent_hbm.at[pl.ds(t_idx[s], 1), :],
                    tbuf.at[slot_, pl.ds(row, 1), :],
                    sem.at[1, slot_]).start()
            return c

        lax.fori_loop(0, tb // _UNROLL, body, 0)

    @pl.when(blk == 0)
    def _():                                       # prologue: block 0 -> slot 0
        issue(0, 0)

    @pl.when(blk + 1 < nblk)
    def _():                                       # prefetch next block
        issue(blk + 1, 1 - slot)

    # Gather relation rows from the VMEM-resident table while the entity DMAs
    # land (scalar reads stay before the .wait()s on purpose).
    base = blk * tb

    def rel_body(i, c):
        for u in range(_UNROLL):
            row = i * _UNROLL + u
            rbuf[pl.ds(row, 1), :] = rel_ref[pl.ds(r_idx[base + row], 1), :]
        return c

    lax.fori_loop(0, tb // _UNROLL, rel_body, 0)

    # One wait per buffer: the DMA semaphore counts bytes, so a single (tb, D)
    # descriptor covers all tb row copies issued on that semaphore/slot.
    pltpu.make_async_copy(hbuf.at[slot], hbuf.at[slot], sem.at[0, slot]).wait()
    pltpu.make_async_copy(tbuf.at[slot], tbuf.at[slot], sem.at[1, slot]).wait()

    diff = hbuf[slot] + rbuf[...] - tbuf[slot]
    out_ref[...] = _pnorm_rows(diff, p).astype(out_ref.dtype)


# ----------------------------------------------------------------------------
# Wrapper: fused gather + distance for a flat stream of (h, r, t) indices.
# ----------------------------------------------------------------------------
def transe_distances(entity_table, relation_table, h_idx, r_idx, t_idx,
                     *, p, tb=256, entity_in_vmem=None):
    """dist[i] = || E[h_i] + R[r_i] - E[t_i] ||_p  for i in [0, R)."""
    R = int(h_idx.shape[0])
    E, D = entity_table.shape
    Rn, D2 = relation_table.shape
    assert D == D2, "entity / relation embedding dims must match"

    entity_table = entity_table.astype(jnp.float32)
    relation_table = relation_table.astype(jnp.float32)

    # Row tile: multiple of 128, clamped for tiny batches.
    tb = max(128, min(_round_up(tb, 128), _round_up(R, 128)))
    nblk = pl.cdiv(R, tb)
    r_pad = nblk * tb

    def _prep(idx):
        idx = idx.astype(jnp.int32)
        if r_pad != R:
            idx = jnp.pad(idx, (0, r_pad - R))     # pad with index 0 (valid row)
        return idx

    h_idx, r_idx, t_idx = _prep(h_idx), _prep(r_idx), _prep(t_idx)

    if entity_in_vmem is None:
        entity_in_vmem = E * D * 4 <= _ENTITY_VMEM_BUDGET

    # TODO(synk): for very large R, chunk the call at this level (or switch the
    # index streams to per-block SMEM BlockSpec inputs) to bound SMEM prefetch.

    rel_spec = pl.BlockSpec((Rn, D), lambda i, *_: (0, 0))     # VMEM-resident
    out_spec = pl.BlockSpec((tb, 1), lambda i, *_: (i, 0))

    if entity_in_vmem:
        kernel = functools.partial(_transe_vmem_kernel, tb=tb, p=int(p))
        grid_spec = pltpu.PrefetchScalarGridSpec(
            num_scalar_prefetch=3, grid=(nblk,),
            in_specs=[pl.BlockSpec((E, D), lambda i, *_: (0, 0)), rel_spec],
            out_specs=out_spec,
            scratch_shapes=[pltpu.VMEM((tb, D), jnp.float32)])
        dim_sem = ("parallel",)        # carry-free: blocks can shard over TCs
    else:
        kernel = functools.partial(_transe_hbm_kernel, tb=tb, p=int(p))
        grid_spec = pltpu.PrefetchScalarGridSpec(
            num_scalar_prefetch=3, grid=(nblk,),
            in_specs=[pl.BlockSpec(memory_space=pl.ANY), rel_spec],
            out_specs=out_spec,
            scratch_shapes=[pltpu.VMEM((2, tb, D), jnp.float32),   # h slots
                            pltpu.VMEM((2, tb, D), jnp.float32),   # t slots
                            pltpu.VMEM((tb, D), jnp.float32),      # relations
                            pltpu.SemaphoreType.DMA((2, 2))])
        dim_sem = ("arbitrary",)       # double buffer carried across steps

    out = pl.pallas_call(
        kernel,
        out_shape=jax.ShapeDtypeStruct((r_pad, 1), jnp.float32),
        grid_spec=grid_spec,
        compiler_params=pltpu.CompilerParams(
            dimension_semantics=dim_sem,
            vmem_limit_bytes=_VMEM_LIMIT_BYTES),
    )(h_idx, r_idx, t_idx, entity_table, relation_table)

    return out[:R, 0]


# ----------------------------------------------------------------------------
# TransE module in JAX: parameters + glue, Pallas fused hot path.
# ----------------------------------------------------------------------------
class TransE:
    def __init__(self, num_entities, num_relations, embedding_dim,
                 margin, norm, key):
        self.margin = float(margin)
        self.norm = int(norm)
        self.embedding_dim = int(embedding_dim)

        k_ent, k_rel = jax.random.split(key)
        # Xavier/Glorot uniform init, matching nn.init.xavier_uniform_.
        ent_bound = (6.0 / (num_entities + embedding_dim)) ** 0.5
        rel_bound = (6.0 / (num_relations + embedding_dim)) ** 0.5
        # Tables are stored at the TRUE embedding dim (no 128-lane HBM padding).
        self.entity_embeddings = jax.random.uniform(
            k_ent, (num_entities, embedding_dim), jnp.float32,
            minval=-ent_bound, maxval=ent_bound)
        self.relation_embeddings = jax.random.uniform(
            k_rel, (num_relations, embedding_dim), jnp.float32,
            minval=-rel_bound, maxval=rel_bound)

    def forward(self, positive_sample, negative_sample):
        pos_h, pos_r, pos_t = positive_sample
        neg_h, neg_r, neg_t = negative_sample
        b = pos_h.shape[0]

        # Stack positives and negatives -> 3 gather streams instead of 6.
        # TODO(synk): when neg_r is known to equal pos_r (standard corruption),
        # pass the relation stream once and reuse the gathered rows.
        h_idx = jnp.concatenate([pos_h, neg_h]).astype(jnp.int32)
        r_idx = jnp.concatenate([pos_r, neg_r]).astype(jnp.int32)
        t_idx = jnp.concatenate([pos_t, neg_t]).astype(jnp.int32)

        dist = transe_distances(self.entity_embeddings,
                                self.relation_embeddings,
                                h_idx, r_idx, t_idx, p=self.norm)
        return dist[:b], dist[b:]

    def loss(self, pos_dist, neg_dist):
        # nn.MarginRankingLoss(margin)(pos, neg, y=1)
        #   = mean(max(0, -1 * (pos - neg) + margin))
        return jnp.mean(jnp.maximum(0.0, self.margin - (pos_dist - neg_dist)))


if __name__ == "__main__":
    key = jax.random.PRNGKey(0)
    k_params, k_ph, k_pr, k_pt, k_nh, k_nt = jax.random.split(key, 6)

    num_entities = 64
    num_relations = 16
    embedding_dim = 32
    margin = 1.0
    norm = 2
    batch = 96

    model = TransE(num_entities, num_relations, embedding_dim,
                   margin, norm, k_params)

    pos_h = jax.random.randint(k_ph, (batch,), 0, num_entities)
    pos_r = jax.random.randint(k_pr, (batch,), 0, num_relations)
    pos_t = jax.random.randint(k_pt, (batch,), 0, num_entities)
    # Negative samples: corrupt head / tail, same relation (standard TransE).
    neg_h = jax.random.randint(k_nh, (batch,), 0, num_entities)
    neg_r = pos_r
    neg_t = jax.random.randint(k_nt, (batch,), 0, num_entities)

    # Pure-JAX reference.
    def ref_dist(h, r, t):
        d = (model.entity_embeddings[h] + model.relation_embeddings[r]
             - model.entity_embeddings[t])
        return jnp.linalg.norm(d, ord=norm, axis=1)

    # Path 1 (default): VMEM-resident tables, in-VMEM gather.
    pos_dist, neg_dist = model.forward((pos_h, pos_r, pos_t),
                                       (neg_h, neg_r, neg_t))
    jax.block_until_ready((pos_dist, neg_dist))
    assert jnp.allclose(pos_dist, ref_dist(pos_h, pos_r, pos_t),
                        atol=1e-4, rtol=1e-4)
    assert jnp.allclose(neg_dist, ref_dist(neg_h, neg_r, neg_t),
                        atol=1e-4, rtol=1e-4)

    # Path 2 (forced): HBM entity table, double-buffered row-DMA gather.
    # tb=128 so the 192 triples span 2 grid blocks and exercise the
    # cross-step double-buffer hand-off and per-buffer waits.
    h_all = jnp.concatenate([pos_h, neg_h]).astype(jnp.int32)
    r_all = jnp.concatenate([pos_r, neg_r]).astype(jnp.int32)
    t_all = jnp.concatenate([pos_t, neg_t]).astype(jnp.int32)
    dist_hbm = transe_distances(model.entity_embeddings,
                                model.relation_embeddings,
                                h_all, r_all, t_all, p=norm, tb=128,
                                entity_in_vmem=False)
    jax.block_until_ready(dist_hbm)
    assert jnp.allclose(dist_hbm, ref_dist(h_all, r_all, t_all),
                        atol=1e-4, rtol=1e-4)

    # Exercise the loss too (plain JAX, as in the original module).
    _ = jax.block_until_ready(model.loss(pos_dist, neg_dist))

    print("KERNEL_OK")
</pallas_src>

<mosaic_0001>
module attributes {stable_mosaic.version = 11 : i64} {
  func.func @_transe_vmem_kernel(%arg0: i32, %arg1: memref<256xi32, #tpu.memory_space<smem>>, %arg2: memref<256xi32, #tpu.memory_space<smem>>, %arg3: memref<256xi32, #tpu.memory_space<smem>>, %arg4: memref<64x32xf32, #tpu.memory_space<vmem>>, %arg5: memref<16x32xf32, #tpu.memory_space<vmem>>, %arg6: memref<256x1xf32, #tpu.memory_space<vmem>>, %arg7: memref<256x32xf32, #tpu.memory_space<vmem>>) attributes {dimension_semantics = [#tpu.dimension_semantics<parallel>], iteration_bounds = array<i64: 1>, scalar_prefetch = 3 : i64, scratch_operands = 1 : i64, tpu.core_type = #tpu.core_type<tc>, window_params = [{pipeline_mode = #tpu.pipeline_mode<synchronous>, transform_indices = @transform_0, window_bounds = array<i64: 64, 32>}, {pipeline_mode = #tpu.pipeline_mode<synchronous>, transform_indices = @transform_1, window_bounds = array<i64: 16, 32>}, {transform_indices = @transform_2, window_bounds = array<i64: 256, 1>}]} {
    %c256_i32 = arith.constant 256 : i32
    %0 = arith.muli %arg0, %c256_i32 : i32
    %c0_i32 = arith.constant 0 : i32
    %c32_i32 = arith.constant 32 : i32
    %1 = arith.addi %c0_i32, %c32_i32 : i32
    %c1_i32 = arith.constant 1 : i32
    scf.for %arg8 = %c0_i32 to %1 step %c1_i32  : i32 {
      %c8_i32 = arith.constant 8 : i32
      %8 = arith.muli %arg8, %c8_i32 : i32
      %c0_i32_4 = arith.constant 0 : i32
      %9 = arith.addi %8, %c0_i32_4 : i32
      %10 = arith.addi %0, %9 : i32
      %11 = arith.index_cast %10 : i32 to index
      %12 = memref.load %arg1[%11] : memref<256xi32, #tpu.memory_space<smem>>
      %13 = arith.index_cast %12 : i32 to index
      %c0_5 = arith.constant 0 : index
      %14 = vector.load %arg4[%13, %c0_5] : memref<64x32xf32, #tpu.memory_space<vmem>>, vector<1x32xf32>
      %15 = arith.index_cast %10 : i32 to index
      %16 = memref.load %arg2[%15] : memref<256xi32, #tpu.memory_space<smem>>
      %17 = arith.index_cast %16 : i32 to index
      %c0_6 = arith.constant 0 : index
      %18 = vector.load %arg5[%17, %c0_6] : memref<16x32xf32, #tpu.memory_space<vmem>>, vector<1x32xf32>
      %19 = arith.index_cast %10 : i32 to index
      %20 = memref.load %arg3[%19] : memref<256xi32, #tpu.memory_space<smem>>
      %21 = arith.index_cast %20 : i32 to index
      %c0_7 = arith.constant 0 : index
      %22 = vector.load %arg4[%21, %c0_7] : memref<64x32xf32, #tpu.memory_space<vmem>>, vector<1x32xf32>
      %23 = arith.addf %14, %18 : vector<1x32xf32>
      %24 = arith.subf %23, %22 : vector<1x32xf32>
      %25 = arith.index_cast %9 : i32 to index
      %c0_8 = arith.constant 0 : index
      %26 = vector.load %arg7[%25, %c0_8] : memref<256x32xf32, #tpu.memory_space<vmem>>, vector<1x32xf32>
      tpu.vector_store %arg7[%25, %c0_8], %24 {strides = array<i32>} : memref<256x32xf32, #tpu.memory_space<vmem>>, vector<1x32xf32>,
      %c8_i32_9 = arith.constant 8 : i32
      %27 = arith.muli %arg8, %c8_i32_9 : i32
      %c1_i32_10 = arith.constant 1 : i32
      %28 = arith.addi %27, %c1_i32_10 : i32
      %29 = arith.addi %0, %28 : i32
      %30 = arith.index_cast %29 : i32 to index
      %31 = memref.load %arg1[%30] : memref<256xi32, #tpu.memory_space<smem>>
      %32 = arith.index_cast %31 : i32 to index
      %c0_11 = arith.constant 0 : index
      %33 = vector.load %arg4[%32, %c0_11] : memref<64x32xf32, #tpu.memory_space<vmem>>, vector<1x32xf32>
      %34 = arith.index_cast %29 : i32 to index
      %35 = memref.load %arg2[%34] : memref<256xi32, #tpu.memory_space<smem>>
      %36 = arith.index_cast %35 : i32 to index
      %c0_12 = arith.constant 0 : index
      %37 = vector.load %arg5[%36, %c0_12] : memref<16x32xf32, #tpu.memory_space<vmem>>, vector<1x32xf32>
      %38 = arith.index_cast %29 : i32 to index
      %39 = memref.load %arg3[%38] : memref<256xi32, #tpu.memory_space<smem>>
      %40 = arith.index_cast %39 : i32 to index
      %c0_13 = arith.constant 0 : index
      %41 = vector.load %arg4[%40, %c0_13] : memref<64x32xf32, #tpu.memory_space<vmem>>, vector<1x32xf32>
      %42 = arith.addf %33, %37 : vector<1x32xf32>
      %43 = arith.subf %42, %41 : vector<1x32xf32>
      %44 = arith.index_cast %28 : i32 to index
      %c0_14 = arith.constant 0 : index
      %45 = vector.load %arg7[%44, %c0_14] : memref<256x32xf32, #tpu.memory_space<vmem>>, vector<1x32xf32>
      tpu.vector_store %arg7[%44, %c0_14], %43 {strides = array<i32>} : memref<256x32xf32, #tpu.memory_space<vmem>>, vector<1x32xf32>,
      %c8_i32_15 = arith.constant 8 : i32
      %46 = arith.muli %arg8, %c8_i32_15 : i32
      %c2_i32 = arith.constant 2 : i32
      %47 = arith.addi %46, %c2_i32 : i32
      %48 = arith.addi %0, %47 : i32
      %49 = arith.index_cast %48 : i32 to index
      %50 = memref.load %arg1[%49] : memref<256xi32, #tpu.memory_space<smem>>
      %51 = arith.index_cast %50 : i32 to index
      %c0_16 = arith.constant 0 : index
      %52 = vector.load %arg4[%51, %c0_16] : memref<64x32xf32, #tpu.memory_space<vmem>>, vector<1x32xf32>
      %53 = arith.index_cast %48 : i32 to index
      %54 = memref.load %arg2[%53] : memref<256xi32, #tpu.memory_space<smem>>
      %55 = arith.index_cast %54 : i32 to index
      %c0_17 = arith.constant 0 : index
      %56 = vector.load %arg5[%55, %c0_17] : memref<16x32xf32, #tpu.memory_space<vmem>>, vector<1x32xf32>
      %57 = arith.index_cast %48 : i32 to index
      %58 = memref.load %arg3[%57] : memref<256xi32, #tpu.memory_space<smem>>
      %59 = arith.index_cast %58 : i32 to index
      %c0_18 = arith.constant 0 : index
      %60 = vector.load %arg4[%59, %c0_18] : memref<64x32xf32, #tpu.memory_space<vmem>>, vector<1x32xf32>
      %61 = arith.addf %52, %56 : vector<1x32xf32>
      %62 = arith.subf %61, %60 : vector<1x32xf32>
      %63 = arith.index_cast %47 : i32 to index
      %c0_19 = arith.constant 0 : index
      %64 = vector.load %arg7[%63, %c0_19] : memref<256x32xf32, #tpu.memory_space<vmem>>, vector<1x32xf32>
      tpu.vector_store %arg7[%63, %c0_19], %62 {strides = array<i32>} : memref<256x32xf32, #tpu.memory_space<vmem>>, vector<1x32xf32>,
      %c8_i32_20 = arith.constant 8 : i32
      %65 = arith.muli %arg8, %c8_i32_20 : i32
      %c3_i32 = arith.constant 3 : i32
      %66 = arith.addi %65, %c3_i32 : i32
      %67 = arith.addi %0, %66 : i32
      %68 = arith.index_cast %67 : i32 to index
      %69 = memref.load %arg1[%68] : memref<256xi32, #tpu.memory_space<smem>>
      %70 = arith.index_cast %69 : i32 to index
      %c0_21 = arith.constant 0 : index
      %71 = vector.load %arg4[%70, %c0_21] : memref<64x32xf32, #tpu.memory_space<vmem>>, vector<1x32xf32>
      %72 = arith.index_cast %67 : i32 to index
      %73 = memref.load %arg2[%72] : memref<256xi32, #tpu.memory_space<smem>>
      %74 = arith.index_cast %73 : i32 to index
      %c0_22 = arith.constant 0 : index
      %75 = vector.load %arg5[%74, %c0_22] : memref<16x32xf32, #tpu.memory_space<vmem>>, vector<1x32xf32>
      %76 = arith.index_cast %67 : i32 to index
      %77 = memref.load %arg3[%76] : memref<256xi32, #tpu.memory_space<smem>>
      %78 = arith.index_cast %77 : i32 to index
      %c0_23 = arith.constant 0 : index
      %79 = vector.load %arg4[%78, %c0_23] : memref<64x32xf32, #tpu.memory_space<vmem>>, vector<1x32xf32>
      %80 = arith.addf %71, %75 : vector<1x32xf32>
      %81 = arith.subf %80, %79 : vector<1x32xf32>
      %82 = arith.index_cast %66 : i32 to index
      %c0_24 = arith.constant 0 : index
      %83 = vector.load %arg7[%82, %c0_24] : memref<256x32xf32, #tpu.memory_space<vmem>>, vector<1x32xf32>
      tpu.vector_store %arg7[%82, %c0_24], %81 {strides = array<i32>} : memref<256x32xf32, #tpu.memory_space<vmem>>, vector<1x32xf32>,
      %c8_i32_25 = arith.constant 8 : i32
      %84 = arith.muli %arg8, %c8_i32_25 : i32
      %c4_i32 = arith.constant 4 : i32
      %85 = arith.addi %84, %c4_i32 : i32
      %86 = arith.addi %0, %85 : i32
      %87 = arith.index_cast %86 : i32 to index
      %88 = memref.load %arg1[%87] : memref<256xi32, #tpu.memory_space<smem>>
      %89 = arith.index_cast %88 : i32 to index
      %c0_26 = arith.constant 0 : index
      %90 = vector.load %arg4[%89, %c0_26] : memref<64x32xf32, #tpu.memory_space<vmem>>, vector<1x32xf32>
      %91 = arith.index_cast %86 : i32 to index
      %92 = memref.load %arg2[%91] : memref<256xi32, #tpu.memory_space<smem>>
      %93 = arith.index_cast %92 : i32 to index
      %c0_27 = arith.constant 0 : index
      %94 = vector.load %arg5[%93, %c0_27] : memref<16x32xf32, #tpu.memory_space<vmem>>, vector<1x32xf32>
      %95 = arith.index_cast %86 : i32 to index
      %96 = memref.load %arg3[%95] : memref<256xi32, #tpu.memory_space<smem>>
      %97 = arith.index_cast %96 : i32 to index
      %c0_28 = arith.constant 0 : index
      %98 = vector.load %arg4[%97, %c0_28] : memref<64x32xf32, #tpu.memory_space<vmem>>, vector<1x32xf32>
      %99 = arith.addf %90, %94 : vector<1x32xf32>
      %100 = arith.subf %99, %98 : vector<1x32xf32>
      %101 = arith.index_cast %85 : i32 to index
      %c0_29 = arith.constant 0 : index
      %102 = vector.load %arg7[%101, %c0_29] : memref<256x32xf32, #tpu.memory_space<vmem>>, vector<1x32xf32>
      tpu.vector_store %arg7[%101, %c0_29], %100 {strides = array<i32>} : memref<256x32xf32, #tpu.memory_space<vmem>>, vector<1x32xf32>,
      %c8_i32_30 = arith.constant 8 : i32
      %103 = arith.muli %arg8, %c8_i32_30 : i32
      %c5_i32 = arith.constant 5 : i32
      %104 = arith.addi %103, %c5_i32 : i32
      %105 = arith.addi %0, %104 : i32
      %106 = arith.index_cast %105 : i32 to index
      %107 = memref.load %arg1[%106] : memref<256xi32, #tpu.memory_space<smem>>
      %108 = arith.index_cast %107 : i32 to index
      %c0_31 = arith.constant 0 : index
      %109 = vector.load %arg4[%108, %c0_31] : memref<64x32xf32, #tpu.memory_space<vmem>>, vector<1x32xf32>
      %110 = arith.index_cast %105 : i32 to index
      %111 = memref.load %arg2[%110] : memref<256xi32, #tpu.memory_space<smem>>
      %112 = arith.index_cast %111 : i32 to index
      %c0_32 = arith.constant 0 : index
      %113 = vector.load %arg5[%112, %c0_32] : memref<16x32xf32, #tpu.memory_space<vmem>>, vector<1x32xf32>
      %114 = arith.index_cast %105 : i32 to index
      %115 = memref.load %arg3[%114] : memref<256xi32, #tpu.memory_space<smem>>
      %116 = arith.index_cast %115 : i32 to index
      %c0_33 = arith.constant 0 : index
      %117 = vector.load %arg4[%116, %c0_33] : memref<64x32xf32, #tpu.memory_space<vmem>>, vector<1x32xf32>
      %118 = arith.addf %109, %113 : vector<1x32xf32>
      %119 = arith.subf %118, %117 : vector<1x32xf32>
      %120 = arith.index_cast %104 : i32 to index
      %c0_34 = arith.constant 0 : index
      %121 = vector.load %arg7[%120, %c0_34] : memref<256x32xf32, #tpu.memory_space<vmem>>, vector<1x32xf32>
      tpu.vector_store %arg7[%120, %c0_34], %119 {strides = array<i32>} : memref<256x32xf32, #tpu.memory_space<vmem>>, vector<1x32xf32>,
      %c8_i32_35 = arith.constant 8 : i32
      %122 = arith.muli %arg8, %c8_i32_35 : i32
      %c6_i32 = arith.constant 6 : i32
      %123 = arith.addi %122, %c6_i32 : i32
      %124 = arith.addi %0, %123 : i32
      %125 = arith.index_cast %124 : i32 to index
      %126 = memref.load %arg1[%125] : memref<256xi32, #tpu.memory_space<smem>>
      %127 = arith.index_cast %126 : i32 to index
      %c0_36 = arith.constant 0 : index
      %128 = vector.load %arg4[%127, %c0_36] : memref<64x32xf32, #tpu.memory_space<vmem>>, vector<1x32xf32>
      %129 = arith.index_cast %124 : i32 to index
      %130 = memref.load %arg2[%129] : memref<256xi32, #tpu.memory_space<smem>>
      %131 = arith.index_cast %130 : i32 to index
      %c0_37 = arith.constant 0 : index
      %132 = vector.load %arg5[%131, %c0_37] : memref<16x32xf32, #tpu.memory_space<vmem>>, vector<1x32xf32>
      %133 = arith.index_cast %124 : i32 to index
      %134 = memref.load %arg3[%133] : memref<256xi32, #tpu.memory_space<smem>>
      %135 = arith.index_cast %134 : i32 to index
      %c0_38 = arith.constant 0 : index
      %136 = vector.load %arg4[%135, %c0_38] : memref<64x32xf32, #tpu.memory_space<vmem>>, vector<1x32xf32>
      %137 = arith.addf %128, %132 : vector<1x32xf32>
      %138 = arith.subf %137, %136 : vector<1x32xf32>
      %139 = arith.index_cast %123 : i32 to index
      %c0_39 = arith.constant 0 : index
      %140 = vector.load %arg7[%139, %c0_39] : memref<256x32xf32, #tpu.memory_space<vmem>>, vector<1x32xf32>
      tpu.vector_store %arg7[%139, %c0_39], %138 {strides = array<i32>} : memref<256x32xf32, #tpu.memory_space<vmem>>, vector<1x32xf32>,
      %c8_i32_40 = arith.constant 8 : i32
      %141 = arith.muli %arg8, %c8_i32_40 : i32
      %c7_i32 = arith.constant 7 : i32
      %142 = arith.addi %141, %c7_i32 : i32
      %143 = arith.addi %0, %142 : i32
      %144 = arith.index_cast %143 : i32 to index
      %145 = memref.load %arg1[%144] : memref<256xi32, #tpu.memory_space<smem>>
      %146 = arith.index_cast %145 : i32 to index
      %c0_41 = arith.constant 0 : index
      %147 = vector.load %arg4[%146, %c0_41] : memref<64x32xf32, #tpu.memory_space<vmem>>, vector<1x32xf32>
      %148 = arith.index_cast %143 : i32 to index
      %149 = memref.load %arg2[%148] : memref<256xi32, #tpu.memory_space<smem>>
      %150 = arith.index_cast %149 : i32 to index
      %c0_42 = arith.constant 0 : index
      %151 = vector.load %arg5[%150, %c0_42] : memref<16x32xf32, #tpu.memory_space<vmem>>, vector<1x32xf32>
      %152 = arith.index_cast %143 : i32 to index
      %153 = memref.load %arg3[%152] : memref<256xi32, #tpu.memory_space<smem>>
      %154 = arith.index_cast %153 : i32 to index
      %c0_43 = arith.constant 0 : index
      %155 = vector.load %arg4[%154, %c0_43] : memref<64x32xf32, #tpu.memory_space<vmem>>, vector<1x32xf32>
      %156 = arith.addf %147, %151 : vector<1x32xf32>
      %157 = arith.subf %156, %155 : vector<1x32xf32>
      %158 = arith.index_cast %142 : i32 to index
      %c0_44 = arith.constant 0 : index
      %159 = vector.load %arg7[%158, %c0_44] : memref<256x32xf32, #tpu.memory_space<vmem>>, vector<1x32xf32>
      tpu.vector_store %arg7[%158, %c0_44], %157 {strides = array<i32>} : memref<256x32xf32, #tpu.memory_space<vmem>>, vector<1x32xf32>,
    }
    %c32_i32_0 = arith.constant 32 : i32
    %c0 = arith.constant 0 : index
    %c0_1 = arith.constant 0 : index
    %2 = vector.load %arg7[%c0, %c0_1] : memref<256x32xf32, #tpu.memory_space<vmem>>, vector<256x32xf32>
    %3 = arith.mulf %2, %2 : vector<256x32xf32>
    %cst = arith.constant dense<0.000000e+00> : vector<256xf32>
    %4 = vector.multi_reduction <add>, %3, %cst [1] : vector<256x32xf32> to vector<256xf32>
    %5 = vector.shape_cast %4 : vector<256xf32> to vector<256x1xf32>
    %6 = math.sqrt %5 : vector<256x1xf32>
    %c0_2 = arith.constant 0 : index
    %c0_3 = arith.constant 0 : index
    %7 = vector.load %arg6[%c0_2, %c0_3] : memref<256x1xf32, #tpu.memory_space<vmem>>, vector<256x1xf32>
    tpu.vector_store %arg6[%c0_2, %c0_3], %6 {strides = array<i32>} : memref<256x1xf32, #tpu.memory_space<vmem>>, vector<256x1xf32>,
    return
  }
  func.func @transform_0(%arg0: i32, %arg1: memref<256xi32, #tpu.memory_space<smem>>, %arg2: memref<256xi32, #tpu.memory_space<smem>>, %arg3: memref<256xi32, #tpu.memory_space<smem>>) -> (i32, i32) {
    %c0_i32 = arith.constant 0 : i32
    %c0_i32_0 = arith.constant 0 : i32
    %c0_i32_1 = arith.constant 0 : i32
    return %c0_i32, %c0_i32_0 : i32, i32
  }
  func.func @transform_1(%arg0: i32, %arg1: memref<256xi32, #tpu.memory_space<smem>>, %arg2: memref<256xi32, #tpu.memory_space<smem>>, %arg3: memref<256xi32, #tpu.memory_space<smem>>) -> (i32, i32) {
    %c0_i32 = arith.constant 0 : i32
    %c0_i32_0 = arith.constant 0 : i32
    %c0_i32_1 = arith.constant 0 : i32
    return %c0_i32, %c0_i32_0 : i32, i32
  }
  func.func @transform_2(%arg0: i32, %arg1: memref<256xi32, #tpu.memory_space<smem>>, %arg2: memref<256xi32, #tpu.memory_space<smem>>, %arg3: memref<256xi32, #tpu.memory_space<smem>>) -> (i32, i32) {
    %c0_i32 = arith.constant 0 : i32
    %c0_i32_0 = arith.constant 0 : i32
    return %arg0, %c0_i32 : i32, i32
  }
}

</mosaic_0001>

<llo_original>
// kernel: tpu_custom_call.1
$region0: #{tpu_custom_call.1}
  #allocation0 [shape = 'u32[]', space=smem, size = 0x4, offset = 0x4, fixed_abs, tag = 'smem constant byte address 0x4 - core index']
  #allocation1 [shape = 'u32[144,128]{1,0:T(1,128)}', space=vmem, size = 0x12000, scoped, tag = 'internal scratch']
  #allocation2 [shape = 'f32[256,32]{1,0:T(8,128)}', space=vmem, size = 0x20000, scoped, tag = 'scratch operand']
  #allocation3 [shape = 's32[1]{0}', space=sflag, size = 0x4, scoped, tag = 'scoped memory for tpu_custom_call.1']
  #allocation4 [shape = 'u8[1024]{0}', space=smem, size = 0x400, scoped, tag = 'prefetched SMEM operand 0']
  #allocation5 [shape = 'u8[1024]{0}', space=smem, size = 0x400, scoped, tag = 'prefetched SMEM operand 1']
  #allocation6 [shape = 'u8[1024]{0}', space=smem, size = 0x400, scoped, tag = 'prefetched SMEM operand 2']
  %s0 = inlined_call_operand.vmem [shape: s32[256], index: 0, kind: input, shape index: {}]
  %s1 = inlined_call_operand.vmem [shape: s32[256], index: 1, kind: input, shape index: {}]
  %s2 = inlined_call_operand.vmem [shape: s32[256], index: 2, kind: input, shape index: {}]
  %s3 = inlined_call_operand.vmem [shape: f32[64,32], index: 3, kind: input, shape index: {}]
  %s4 = inlined_call_operand.vmem [shape: f32[16,32], index: 4, kind: input, shape index: {}]
  %s5 = inlined_call_operand.vmem [shape: f32[256,1], index: 5, kind: output, shape index: {}]
  %s6 = sld [smem:[#allocation0]]
  $region25: #{tpu_custom_call.1} parent=0
    _
  %s8 = ssub.s32 1, %s6
  %s9 = scalar_select 0, %s8, %s6
  %s10 = sshll.u32 %s0, 4
  %s11 = int_to_ptr.vmem [resolvable:$true] %s10
  %13 = dma.vmem_to_smem %s11, 32, [#allocation4], [#allocation3]
  %s14 = sshll.u32 %s1, 4
  %s15 = int_to_ptr.vmem [resolvable:$true] %s14
  %17 = dma.vmem_to_smem %s15, 32, [#allocation5], [#allocation3]
  %s18 = sshll.u32 %s2, 4
  %s19 = int_to_ptr.vmem [resolvable:$true] %s18
  %21 = dma.vmem_to_smem %s19, 32, [#allocation6], [#allocation3]
  %22 = dma.done [#allocation3], 96
  %23 = sfence
  // Predicated region
  $region2: #{tpu_custom_call.1} parent=0 // pred_check
    _
  $region3: #{tpu_custom_call.1} parent=0 // pred_check_branch
    %25 = sbr.rel (0) target = $region5
  $region4: #{tpu_custom_call.1} parent=0 // pred_region
    _
  $region5: #{tpu_custom_call.1} parent=0 // pred_fallthru
    _
  // Predicated region
  $region6: #{tpu_custom_call.1} parent=0 // pred_check
    _
  $region7: #{tpu_custom_call.1} parent=0 // pred_check_branch
    %27 = sbr.rel (0) target = $region9
  $region8: #{tpu_custom_call.1} parent=0 // pred_region
    _
  $region9: #{tpu_custom_call.1} parent=0 // pred_fallthru
    _
  %s28 = smul.u32 0, 256
  loop: start=0, step=1, limit=32
  $region10: #{tpu_custom_call.1} parent=0 // loop_pre_header
    _
  $region11: #{tpu_custom_call.1} parent=0 // loop_header
    %s30 = sphi 0, %s34
    %p31 = scmp.ge.s32.totalorder %s30, 32
  $region12: #{tpu_custom_call.1} parent=0 // loop_header_branch
    %33 = sbr.rel (%p31) target = $region16
  $region13: #{tpu_custom_call.1} parent=0 // loop_body
    %s35 = smul.u32 %s30, 8
    %s36 = sadd.s32 %s28, %s35
    %s37 = sld [smem:[#allocation4 + %s36]]
    %s38 = scalar_lea.vmem %s3, %s37
    %v39 = vld [vmem:[%s38] sm:$0x1]
    %s40 = sld [smem:[#allocation5 + %s36]]
    %s41 = scalar_lea.vmem %s4, %s40
    %v42 = vld [vmem:[%s41] sm:$0x1]
    %s43 = sld [smem:[#allocation6 + %s36]]
    %s44 = scalar_lea.vmem %s3, %s43
    %v45 = vld [vmem:[%s44] sm:$0x1]
    %v46 = vadd.f32 %v39, %v42
    %v47 = vsub.f32 %v46, %v45
    %s48 = scalar_lea.vmem [#allocation2], %s35
    %vm49 = vcmask 253952
    %50 = vst.msk [vmem:[%s48] sm:$0x1] %vm49, %v47
    %s51 = sadd.s32 %s35, 1
    %s52 = sadd.s32 %s28, %s51
    %s53 = sld [smem:[#allocation4 + %s52]]
    %s54 = scalar_lea.vmem %s3, %s53
    %v55 = vld [vmem:[%s54] sm:$0x1]
    %s56 = sld [smem:[#allocation5 + %s52]]
    %s57 = scalar_lea.vmem %s4, %s56
    %v58 = vld [vmem:[%s57] sm:$0x1]
    %s59 = sld [smem:[#allocation6 + %s52]]
    %s60 = scalar_lea.vmem %s3, %s59
    %v61 = vld [vmem:[%s60] sm:$0x1]
    %v62 = vadd.f32 %v55, %v58
    %v63 = vsub.f32 %v62, %v61
    %s64 = scalar_lea.vmem [#allocation2], %s51
    %65 = vst.msk [vmem:[%s64] sm:$0x1] %vm49, %v63
    %s66 = sadd.s32 %s35, 2
    %s67 = sadd.s32 %s28, %s66
    %s68 = sld [smem:[#allocation4 + %s67]]
    %s69 = scalar_lea.vmem %s3, %s68
    %v70 = vld [vmem:[%s69] sm:$0x1]
    %s71 = sld [smem:[#allocation5 + %s67]]
    %s72 = scalar_lea.vmem %s4, %s71
    %v73 = vld [vmem:[%s72] sm:$0x1]
    %s74 = sld [smem:[#allocation6 + %s67]]
    %s75 = scalar_lea.vmem %s3, %s74
    %v76 = vld [vmem:[%s75] sm:$0x1]
    %v77 = vadd.f32 %v70, %v73
    %v78 = vsub.f32 %v77, %v76
    %s79 = scalar_lea.vmem [#allocation2], %s66
    %80 = vst.msk [vmem:[%s79] sm:$0x1] %vm49, %v78
    %s81 = sadd.s32 %s35, 3
    %s82 = sadd.s32 %s28, %s81
    %s83 = sld [smem:[#allocation4 + %s82]]
    %s84 = scalar_lea.vmem %s3, %s83
    %v85 = vld [vmem:[%s84] sm:$0x1]
    %s86 = sld [smem:[#allocation5 + %s82]]
    %s87 = scalar_lea.vmem %s4, %s86
    %v88 = vld [vmem:[%s87] sm:$0x1]
    %s89 = sld [smem:[#allocation6 + %s82]]
    %s90 = scalar_lea.vmem %s3, %s89
    %v91 = vld [vmem:[%s90] sm:$0x1]
    %v92 = vadd.f32 %v85, %v88
    %v93 = vsub.f32 %v92, %v91
    %s94 = scalar_lea.vmem [#allocation2], %s81
    %95 = vst.msk [vmem:[%s94] sm:$0x1] %vm49, %v93
    %s96 = sadd.s32 %s35, 4
    %s97 = sadd.s32 %s28, %s96
    %s98 = sld [smem:[#allocation4 + %s97]]
    %s99 = scalar_lea.vmem %s3, %s98
    %v100 = vld [vmem:[%s99] sm:$0x1]
    %s101 = sld [smem:[#allocation5 + %s97]]
    %s102 = scalar_lea.vmem %s4, %s101
    %v103 = vld [vmem:[%s102] sm:$0x1]
    %s104 = sld [smem:[#allocation6 + %s97]]
    %s105 = scalar_lea.vmem %s3, %s104
    %v106 = vld [vmem:[%s105] sm:$0x1]
    %v107 = vadd.f32 %v100, %v103
    %v108 = vsub.f32 %v107, %v106
    %s109 = scalar_lea.vmem [#allocation2], %s96
    %110 = vst.msk [vmem:[%s109] sm:$0x1] %vm49, %v108
    %s111 = sadd.s32 %s35, 5
    %s112 = sadd.s32 %s28, %s111
    %s113 = sld [smem:[#allocation4 + %s112]]
    %s114 = scalar_lea.vmem %s3, %s113
    %v115 = vld [vmem:[%s114] sm:$0x1]
    %s116 = sld [smem:[#allocation5 + %s112]]
    %s117 = scalar_lea.vmem %s4, %s116
    %v118 = vld [vmem:[%s117] sm:$0x1]
    %s119 = sld [smem:[#allocation6 + %s112]]
    %s120 = scalar_lea.vmem %s3, %s119
    %v121 = vld [vmem:[%s120] sm:$0x1]
    %v122 = vadd.f32 %v115, %v118
    %v123 = vsub.f32 %v122, %v121
    %s124 = scalar_lea.vmem [#allocation2], %s111
    %125 = vst.msk [vmem:[%s124] sm:$0x1] %vm49, %v123
    %s126 = sadd.s32 %s35, 6
    %s127 = sadd.s32 %s28, %s126
    %s128 = sld [smem:[#allocation4 + %s127]]
    %s129 = scalar_lea.vmem %s3, %s128
    %v130 = vld [vmem:[%s129] sm:$0x1]
    %s131 = sld [smem:[#allocation5 + %s127]]
    %s132 = scalar_lea.vmem %s4, %s131
    %v133 = vld [vmem:[%s132] sm:$0x1]
    %s134 = sld [smem:[#allocation6 + %s127]]
    %s135 = scalar_lea.vmem %s3, %s134
    %v136 = vld [vmem:[%s135] sm:$0x1]
    %v137 = vadd.f32 %v130, %v133
    %v138 = vsub.f32 %v137, %v136
    %s139 = scalar_lea.vmem [#allocation2], %s126
    %140 = vst.msk [vmem:[%s139] sm:$0x1] %vm49, %v138
    %s141 = sadd.s32 %s35, 7
    %s142 = sadd.s32 %s28, %s141
    %s143 = sld [smem:[#allocation4 + %s142]]
    %s144 = scalar_lea.vmem %s3, %s143
    %v145 = vld [vmem:[%s144] sm:$0x1]
    %s146 = sld [smem:[#allocation5 + %s142]]
    %s147 = scalar_lea.vmem %s4, %s146
    %v148 = vld [vmem:[%s147] sm:$0x1]
    %s149 = sld [smem:[#allocation6 + %s142]]
    %s150 = scalar_lea.vmem %s3, %s149
    %v151 = vld [vmem:[%s150] sm:$0x1]
    %v152 = vadd.f32 %v145, %v148
    %v153 = vsub.f32 %v152, %v151
    %s154 = scalar_lea.vmem [#allocation2], %s141
    %155 = vst.msk [vmem:[%s154] sm:$0x1] %vm49, %v153
  $region14: #{tpu_custom_call.1} parent=0 // loop_footer
    %s34 = sadd.s32 1, %s30
  $region15: #{tpu_custom_call.1} parent=0 // loop_footer_branch
    %29 = sbr.rel target = $region11
  $region16: #{tpu_custom_call.1} parent=0 // loop_exit
    _
  %v156 = vld [vmem:[#allocation2] sm:$0xff]
  %v157 = vld [vmem:[#allocation2 + $0x8] sm:$0xff]
  %v158 = vld [vmem:[#allocation2 + $0x10] sm:$0xff]
  %v159 = vld [vmem:[#allocation2 + $0x18] sm:$0xff]
  %v160 = vld [vmem:[#allocation2 + $0x20] sm:$0xff]
  %v161 = vld [vmem:[#allocation2 + $0x28] sm:$0xff]
  %v162 = vld [vmem:[#allocation2 + $0x30] sm:$0xff]
  %v163 = vld [vmem:[#allocation2 + $0x38] sm:$0xff]
  %v164 = vld [vmem:[#allocation2 + $0x40] sm:$0xff]
  %v165 = vld [vmem:[#allocation2 + $0x48] sm:$0xff]
  %v166 = vld [vmem:[#allocation2 + $0x50] sm:$0xff]
  %v167 = vld [vmem:[#allocation2 + $0x58] sm:$0xff]
  %v168 = vld [vmem:[#allocation2 + $0x60] sm:$0xff]
  %v169 = vld [vmem:[#allocation2 + $0x68] sm:$0xff]
  %v170 = vld [vmem:[#allocation2 + $0x70] sm:$0xff]
  %v171 = vld [vmem:[#allocation2 + $0x78] sm:$0xff]
  %v172 = vld [vmem:[#allocation2 + $0x80] sm:$0xff]
  %v173 = vld [vmem:[#allocation2 + $0x88] sm:$0xff]
  %v174 = vld [vmem:[#allocation2 + $0x90] sm:$0xff]
  %v175 = vld [vmem:[#allocation2 + $0x98] sm:$0xff]
  %v176 = vld [vmem:[#allocation2 + $0xa0] sm:$0xff]
  %v177 = vld [vmem:[#allocation2 + $0xa8] sm:$0xff]
  %v178 = vld [vmem:[#allocation2 + $0xb0] sm:$0xff]
  %v179 = vld [vmem:[#allocation2 + $0xb8] sm:$0xff]
  %v180 = vld [vmem:[#allocation2 + $0xc0] sm:$0xff]
  %v181 = vld [vmem:[#allocation2 + $0xc8] sm:$0xff]
  %v182 = vld [vmem:[#allocation2 + $0xd0] sm:$0xff]
  %v183 = vld [vmem:[#allocation2 + $0xd8] sm:$0xff]
  %v184 = vld [vmem:[#allocation2 + $0xe0] sm:$0xff]
  %v185 = vld [vmem:[#allocation2 + $0xe8] sm:$0xff]
  %v186 = vld [vmem:[#allocation2 + $0xf0] sm:$0xff]
  %v187 = vld [vmem:[#allocation2 + $0xf8] sm:$0xff]
  %v188 = vmul.f32 %v156, %v156
  %v189 = vmul.f32 %v157, %v157
  %v190 = vmul.f32 %v158, %v158
  %v191 = vmul.f32 %v159, %v159
  %v192 = vmul.f32 %v160, %v160
  %v193 = vmul.f32 %v161, %v161
  %v194 = vmul.f32 %v162, %v162
  %v195 = vmul.f32 %v163, %v163
  %v196 = vmul.f32 %v164, %v164
  %v197 = vmul.f32 %v165, %v165
  %v198 = vmul.f32 %v166, %v166
  %v199 = vmul.f32 %v167, %v167
  %v200 = vmul.f32 %v168, %v168
  %v201 = vmul.f32 %v169, %v169
  %v202 = vmul.f32 %v170, %v170
  %v203 = vmul.f32 %v171, %v171
  %v204 = vmul.f32 %v172, %v172
  %v205 = vmul.f32 %v173, %v173
  %v206 = vmul.f32 %v174, %v174
  %v207 = vmul.f32 %v175, %v175
  %v208 = vmul.f32 %v176, %v176
  %v209 = vmul.f32 %v177, %v177
  %v210 = vmul.f32 %v178, %v178
  %v211 = vmul.f32 %v179, %v179
  %v212 = vmul.f32 %v180, %v180
  %v213 = vmul.f32 %v181, %v181
  %v214 = vmul.f32 %v182, %v182
  %v215 = vmul.f32 %v183, %v183
  %v216 = vmul.f32 %v184, %v184
  %v217 = vmul.f32 %v185, %v185
  %v218 = vmul.f32 %v186, %v186
  %v219 = vmul.f32 %v187, %v187
  %vm220 = vcmask 261120
  %v221 = vsel %vm220, %v188, 0.0
  %222 = vadd.xlane.f32.xlu0 %v221
  %v223 = vpop.xlane.xlu0 %222
  %v224 = vsel %vm220, %v189, 0.0
  %225 = vadd.xlane.f32.xlu0 %v224
  %v226 = vpop.xlane.xlu0 %225
  %v227 = vsel %vm220, %v190, 0.0
  %228 = vadd.xlane.f32.xlu0 %v227
  %v229 = vpop.xlane.xlu0 %228
  %v230 = vsel %vm220, %v191, 0.0
  %231 = vadd.xlane.f32.xlu0 %v230
  %v232 = vpop.xlane.xlu0 %231
  %v233 = vsel %vm220, %v192, 0.0
  %234 = vadd.xlane.f32.xlu0 %v233
  %v235 = vpop.xlane.xlu0 %234
  %v236 = vsel %vm220, %v193, 0.0
  %237 = vadd.xlane.f32.xlu0 %v236
  %v238 = vpop.xlane.xlu0 %237
  %v239 = vsel %vm220, %v194, 0.0
  %240 = vadd.xlane.f32.xlu0 %v239
  %v241 = vpop.xlane.xlu0 %240
  %v242 = vsel %vm220, %v195, 0.0
  %243 = vadd.xlane.f32.xlu0 %v242
  %v244 = vpop.xlane.xlu0 %243
  %v245 = vsel %vm220, %v196, 0.0
  %246 = vadd.xlane.f32.xlu0 %v245
  %v247 = vpop.xlane.xlu0 %246
  %v248 = vsel %vm220, %v197, 0.0
  %249 = vadd.xlane.f32.xlu0 %v248
  %v250 = vpop.xlane.xlu0 %249
  %v251 = vsel %vm220, %v198, 0.0
  %252 = vadd.xlane.f32.xlu0 %v251
  %v253 = vpop.xlane.xlu0 %252
  %v254 = vsel %vm220, %v199, 0.0
  %255 = vadd.xlane.f32.xlu0 %v254
  %v256 = vpop.xlane.xlu0 %255
  %v257 = vsel %vm220, %v200, 0.0
  %258 = vadd.xlane.f32.xlu0 %v257
  %v259 = vpop.xlane.xlu0 %258
  %v260 = vsel %vm220, %v201, 0.0
  %261 = vadd.xlane.f32.xlu0 %v260
  %v262 = vpop.xlane.xlu0 %261
  %v263 = vsel %vm220, %v202, 0.0
  %264 = vadd.xlane.f32.xlu0 %v263
  %v265 = vpop.xlane.xlu0 %264
  %v266 = vsel %vm220, %v203, 0.0
  %267 = vadd.xlane.f32.xlu0 %v266
  %v268 = vpop.xlane.xlu0 %267
  %v269 = vsel %vm220, %v204, 0.0
  %270 = vadd.xlane.f32.xlu0 %v269
  %v271 = vpop.xlane.xlu0 %270
  %v272 = vsel %vm220, %v205, 0.0
  %273 = vadd.xlane.f32.xlu0 %v272
  %v274 = vpop.xlane.xlu0 %273
  %v275 = vsel %vm220, %v206, 0.0
  %276 = vadd.xlane.f32.xlu0 %v275
  %v277 = vpop.xlane.xlu0 %276
  %v278 = vsel %vm220, %v207, 0.0
  %279 = vadd.xlane.f32.xlu0 %v278
  %v280 = vpop.xlane.xlu0 %279
  %v281 = vsel %vm220, %v208, 0.0
  %282 = vadd.xlane.f32.xlu0 %v281
  %v283 = vpop.xlane.xlu0 %282
  %v284 = vsel %vm220, %v209, 0.0
  %285 = vadd.xlane.f32.xlu0 %v284
  %v286 = vpop.xlane.xlu0 %285
  %v287 = vsel %vm220, %v210, 0.0
  %288 = vadd.xlane.f32.xlu0 %v287
  %v289 = vpop.xlane.xlu0 %288
  %v290 = vsel %vm220, %v211, 0.0
  %291 = vadd.xlane.f32.xlu0 %v290
  %v292 = vpop.xlane.xlu0 %291
  %v293 = vsel %vm220, %v212, 0.0
  %294 = vadd.xlane.f32.xlu0 %v293
  %v295 = vpop.xlane.xlu0 %294
  %v296 = vsel %vm220, %v213, 0.0
  %297 = vadd.xlane.f32.xlu0 %v296
  %v298 = vpop.xlane.xlu0 %297
  %v299 = vsel %vm220, %v214, 0.0
  %300 = vadd.xlane.f32.xlu0 %v299
  %v301 = vpop.xlane.xlu0 %300
  %v302 = vsel %vm220, %v215, 0.0
  %303 = vadd.xlane.f32.xlu0 %v302
  %v304 = vpop.xlane.xlu0 %303
  %v305 = vsel %vm220, %v216, 0.0
  %306 = vadd.xlane.f32.xlu0 %v305
  %v307 = vpop.xlane.xlu0 %306
  %v308 = vsel %vm220, %v217, 0.0
  %309 = vadd.xlane.f32.xlu0 %v308
  %v310 = vpop.xlane.xlu0 %309
  %v311 = vsel %vm220, %v218, 0.0
  %312 = vadd.xlane.f32.xlu0 %v311
  %v313 = vpop.xlane.xlu0 %312
  %v314 = vsel %vm220, %v219, 0.0
  %315 = vadd.xlane.f32.xlu0 %v314
  %v316 = vpop.xlane.xlu0 %315
  %v317 = vrsqrt.pop %v223
  %v318 = vmul.f32 %v223, %v317
  %vm319 = vcmp.eq.f32.partialorder %v223, inf
  %v320 = vsel %vm319, %v223, %v318
  %vm321 = vcmp.eq.f32.partialorder %v223, 0.0
  %v322 = vand.u32 %v223, 2147483648
  %v323 = vsel %vm321, %v322, %v320
  %v324 = vrsqrt.pop %v226
  %v325 = vmul.f32 %v226, %v324
  %vm326 = vcmp.eq.f32.partialorder %v226, inf
  %v327 = vsel %vm326, %v226, %v325
  %vm328 = vcmp.eq.f32.partialorder %v226, 0.0
  %v329 = vand.u32 %v226, 2147483648
  %v330 = vsel %vm328, %v329, %v327
  %v331 = vrsqrt.pop %v229
  %v332 = vmul.f32 %v229, %v331
  %vm333 = vcmp.eq.f32.partialorder %v229, inf
  %v334 = vsel %vm333, %v229, %v332
  %vm335 = vcmp.eq.f32.partialorder %v229, 0.0
  %v336 = vand.u32 %v229, 2147483648
  %v337 = vsel %vm335, %v336, %v334
  %v338 = vrsqrt.pop %v232
  %v339 = vmul.f32 %v232, %v338
  %vm340 = vcmp.eq.f32.partialorder %v232, inf
  %v341 = vsel %vm340, %v232, %v339
  %vm342 = vcmp.eq.f32.partialorder %v232, 0.0
  %v343 = vand.u32 %v232, 2147483648
  %v344 = vsel %vm342, %v343, %v341
  %v345 = vrsqrt.pop %v235
  %v346 = vmul.f32 %v235, %v345
  %vm347 = vcmp.eq.f32.partialorder %v235, inf
  %v348 = vsel %vm347, %v235, %v346
  %vm349 = vcmp.eq.f32.partialorder %v235, 0.0
  %v350 = vand.u32 %v235, 2147483648
  %v351 = vsel %vm349, %v350, %v348
  %v352 = vrsqrt.pop %v238
  %v353 = vmul.f32 %v238, %v352
  %vm354 = vcmp.eq.f32.partialorder %v238, inf
  %v355 = vsel %vm354, %v238, %v353
  %vm356 = vcmp.eq.f32.partialorder %v238, 0.0
  %v357 = vand.u32 %v238, 2147483648
  %v358 = vsel %vm356, %v357, %v355
  %v359 = vrsqrt.pop %v241
  %v360 = vmul.f32 %v241, %v359
  %vm361 = vcmp.eq.f32.partialorder %v241, inf
  %v362 = vsel %vm361, %v241, %v360
  %vm363 = vcmp.eq.f32.partialorder %v241, 0.0
  %v364 = vand.u32 %v241, 2147483648
  %v365 = vsel %vm363, %v364, %v362
  %v366 = vrsqrt.pop %v244
  %v367 = vmul.f32 %v244, %v366
  %vm368 = vcmp.eq.f32.partialorder %v244, inf
  %v369 = vsel %vm368, %v244, %v367
  %vm370 = vcmp.eq.f32.partialorder %v244, 0.0
  %v371 = vand.u32 %v244, 2147483648
  %v372 = vsel %vm370, %v371, %v369
  %v373 = vrsqrt.pop %v247
  %v374 = vmul.f32 %v247, %v373
  %vm375 = vcmp.eq.f32.partialorder %v247, inf
  %v376 = vsel %vm375, %v247, %v374
  %vm377 = vcmp.eq.f32.partialorder %v247, 0.0
  %v378 = vand.u32 %v247, 2147483648
  %v379 = vsel %vm377, %v378, %v376
  %v380 = vrsqrt.pop %v250
  %v381 = vmul.f32 %v250, %v380
  %vm382 = vcmp.eq.f32.partialorder %v250, inf
  %v383 = vsel %vm382, %v250, %v381
  %vm384 = vcmp.eq.f32.partialorder %v250, 0.0
  %v385 = vand.u32 %v250, 2147483648
  %v386 = vsel %vm384, %v385, %v383
  %v387 = vrsqrt.pop %v253
  %v388 = vmul.f32 %v253, %v387
  %vm389 = vcmp.eq.f32.partialorder %v253, inf
  %v390 = vsel %vm389, %v253, %v388
  %vm391 = vcmp.eq.f32.partialorder %v253, 0.0
  %v392 = vand.u32 %v253, 2147483648
  %v393 = vsel %vm391, %v392, %v390
  %v394 = vrsqrt.pop %v256
  %v395 = vmul.f32 %v256, %v394
  %vm396 = vcmp.eq.f32.partialorder %v256, inf
  %v397 = vsel %vm396, %v256, %v395
  %vm398 = vcmp.eq.f32.partialorder %v256, 0.0
  %v399 = vand.u32 %v256, 2147483648
  %v400 = vsel %vm398, %v399, %v397
  %v401 = vrsqrt.pop %v259
  %v402 = vmul.f32 %v259, %v401
  %vm403 = vcmp.eq.f32.partialorder %v259, inf
  %v404 = vsel %vm403, %v259, %v402
  %vm405 = vcmp.eq.f32.partialorder %v259, 0.0
  %v406 = vand.u32 %v259, 2147483648
  %v407 = vsel %vm405, %v406, %v404
  %v408 = vrsqrt.pop %v262
  %v409 = vmul.f32 %v262, %v408
  %vm410 = vcmp.eq.f32.partialorder %v262, inf
  %v411 = vsel %vm410, %v262, %v409
  %vm412 = vcmp.eq.f32.partialorder %v262, 0.0
  %v413 = vand.u32 %v262, 2147483648
  %v414 = vsel %vm412, %v413, %v411
  %v415 = vrsqrt.pop %v265
  %v416 = vmul.f32 %v265, %v415
  %vm417 = vcmp.eq.f32.partialorder %v265, inf
  %v418 = vsel %vm417, %v265, %v416
  %vm419 = vcmp.eq.f32.partialorder %v265, 0.0
  %v420 = vand.u32 %v265, 2147483648
  %v421 = vsel %vm419, %v420, %v418
  %v422 = vrsqrt.pop %v268
  %v423 = vmul.f32 %v268, %v422
  %vm424 = vcmp.eq.f32.partialorder %v268, inf
  %v425 = vsel %vm424, %v268, %v423
  %vm426 = vcmp.eq.f32.partialorder %v268, 0.0
  %v427 = vand.u32 %v268, 2147483648
  %v428 = vsel %vm426, %v427, %v425
  %v429 = vrsqrt.pop %v271
  %v430 = vmul.f32 %v271, %v429
  %vm431 = vcmp.eq.f32.partialorder %v271, inf
  %v432 = vsel %vm431, %v271, %v430
  %vm433 = vcmp.eq.f32.partialorder %v271, 0.0
  %v434 = vand.u32 %v271, 2147483648
  %v435 = vsel %vm433, %v434, %v432
  %v436 = vrsqrt.pop %v274
  %v437 = vmul.f32 %v274, %v436
  %vm438 = vcmp.eq.f32.partialorder %v274, inf
  %v439 = vsel %vm438, %v274, %v437
  %vm440 = vcmp.eq.f32.partialorder %v274, 0.0
  %v441 = vand.u32 %v274, 2147483648
  %v442 = vsel %vm440, %v441, %v439
  %v443 = vrsqrt.pop %v277
  %v444 = vmul.f32 %v277, %v443
  %vm445 = vcmp.eq.f32.partialorder %v277, inf
  %v446 = vsel %vm445, %v277, %v444
  %vm447 = vcmp.eq.f32.partialorder %v277, 0.0
  %v448 = vand.u32 %v277, 2147483648
  %v449 = vsel %vm447, %v448, %v446
  %v450 = vrsqrt.pop %v280
  %v451 = vmul.f32 %v280, %v450
  %vm452 = vcmp.eq.f32.partialorder %v280, inf
  %v453 = vsel %vm452, %v280, %v451
  %vm454 = vcmp.eq.f32.partialorder %v280, 0.0
  %v455 = vand.u32 %v280, 2147483648
  %v456 = vsel %vm454, %v455, %v453
  %v457 = vrsqrt.pop %v283
  %v458 = vmul.f32 %v283, %v457
  %vm459 = vcmp.eq.f32.partialorder %v283, inf
  %v460 = vsel %vm459, %v283, %v458
  %vm461 = vcmp.eq.f32.partialorder %v283, 0.0
  %v462 = vand.u32 %v283, 2147483648
  %v463 = vsel %vm461, %v462, %v460
  %v464 = vrsqrt.pop %v286
  %v465 = vmul.f32 %v286, %v464
  %vm466 = vcmp.eq.f32.partialorder %v286, inf
  %v467 = vsel %vm466, %v286, %v465
  %vm468 = vcmp.eq.f32.partialorder %v286, 0.0
  %v469 = vand.u32 %v286, 2147483648
  %v470 = vsel %vm468, %v469, %v467
  %v471 = vrsqrt.pop %v289
  %v472 = vmul.f32 %v289, %v471
  %vm473 = vcmp.eq.f32.partialorder %v289, inf
  %v474 = vsel %vm473, %v289, %v472
  %vm475 = vcmp.eq.f32.partialorder %v289, 0.0
  %v476 = vand.u32 %v289, 2147483648
  %v477 = vsel %vm475, %v476, %v474
  %v478 = vrsqrt.pop %v292
  %v479 = vmul.f32 %v292, %v478
  %vm480 = vcmp.eq.f32.partialorder %v292, inf
  %v481 = vsel %vm480, %v292, %v479
  %vm482 = vcmp.eq.f32.partialorder %v292, 0.0
  %v483 = vand.u32 %v292, 2147483648
  %v484 = vsel %vm482, %v483, %v481
  %v485 = vrsqrt.pop %v295
  %v486 = vmul.f32 %v295, %v485
  %vm487 = vcmp.eq.f32.partialorder %v295, inf
  %v488 = vsel %vm487, %v295, %v486
  %vm489 = vcmp.eq.f32.partialorder %v295, 0.0
  %v490 = vand.u32 %v295, 2147483648
  %v491 = vsel %vm489, %v490, %v488
  %v492 = vrsqrt.pop %v298
  %v493 = vmul.f32 %v298, %v492
  %vm494 = vcmp.eq.f32.partialorder %v298, inf
  %v495 = vsel %vm494, %v298, %v493
  %vm496 = vcmp.eq.f32.partialorder %v298, 0.0
  %v497 = vand.u32 %v298, 2147483648
  %v498 = vsel %vm496, %v497, %v495
  %v499 = vrsqrt.pop %v301
  %v500 = vmul.f32 %v301, %v499
  %vm501 = vcmp.eq.f32.partialorder %v301, inf
  %v502 = vsel %vm501, %v301, %v500
  %vm503 = vcmp.eq.f32.partialorder %v301, 0.0
  %v504 = vand.u32 %v301, 2147483648
  %v505 = vsel %vm503, %v504, %v502
  %v506 = vrsqrt.pop %v304
  %v507 = vmul.f32 %v304, %v506
  %vm508 = vcmp.eq.f32.partialorder %v304, inf
  %v509 = vsel %vm508, %v304, %v507
  %vm510 = vcmp.eq.f32.partialorder %v304, 0.0
  %v511 = vand.u32 %v304, 2147483648
  %v512 = vsel %vm510, %v511, %v509
  %v513 = vrsqrt.pop %v307
  %v514 = vmul.f32 %v307, %v513
  %vm515 = vcmp.eq.f32.partialorder %v307, inf
  %v516 = vsel %vm515, %v307, %v514
  %vm517 = vcmp.eq.f32.partialorder %v307, 0.0
  %v518 = vand.u32 %v307, 2147483648
  %v519 = vsel %vm517, %v518, %v516
  %v520 = vrsqrt.pop %v310
  %v521 = vmul.f32 %v310, %v520
  %vm522 = vcmp.eq.f32.partialorder %v310, inf
  %v523 = vsel %vm522, %v310, %v521
  %vm524 = vcmp.eq.f32.partialorder %v310, 0.0
  %v525 = vand.u32 %v310, 2147483648
  %v526 = vsel %vm524, %v525, %v523
  %v527 = vrsqrt.pop %v313
  %v528 = vmul.f32 %v313, %v527
  %vm529 = vcmp.eq.f32.partialorder %v313, inf
  %v530 = vsel %vm529, %v313, %v528
  %vm531 = vcmp.eq.f32.partialorder %v313, 0.0
  %v532 = vand.u32 %v313, 2147483648
  %v533 = vsel %vm531, %v532, %v530
  %v534 = vrsqrt.pop %v316
  %v535 = vmul.f32 %v316, %v534
  %vm536 = vcmp.eq.f32.partialorder %v316, inf
  %v537 = vsel %vm536, %v316, %v535
  %vm538 = vcmp.eq.f32.partialorder %v316, 0.0
  %v539 = vand.u32 %v316, 2147483648
  %v540 = vsel %vm538, %v539, %v537
  %vm541 = vcmask 7168
  %542 = vst.msk [vmem:[%s5] sm:$0xff] %vm541, %v323
  %543 = vst.msk [vmem:[%s5 + $0x8] sm:$0xff] %vm541, %v330
  %544 = vst.msk [vmem:[%s5 + $0x10] sm:$0xff] %vm541, %v337
  %545 = vst.msk [vmem:[%s5 + $0x18] sm:$0xff] %vm541, %v344
  %546 = vst.msk [vmem:[%s5 + $0x20] sm:$0xff] %vm541, %v351
  %547 = vst.msk [vmem:[%s5 + $0x28] sm:$0xff] %vm541, %v358
  %548 = vst.msk [vmem:[%s5 + $0x30] sm:$0xff] %vm541, %v365
  %549 = vst.msk [vmem:[%s5 + $0x38] sm:$0xff] %vm541, %v372
  %550 = vst.msk [vmem:[%s5 + $0x40] sm:$0xff] %vm541, %v379
  %551 = vst.msk [vmem:[%s5 + $0x48] sm:$0xff] %vm541, %v386
  %552 = vst.msk [vmem:[%s5 + $0x50] sm:$0xff] %vm541, %v393
  %553 = vst.msk [vmem:[%s5 + $0x58] sm:$0xff] %vm541, %v400
  %554 = vst.msk [vmem:[%s5 + $0x60] sm:$0xff] %vm541, %v407
  %555 = vst.msk [vmem:[%s5 + $0x68] sm:$0xff] %vm541, %v414
  %556 = vst.msk [vmem:[%s5 + $0x70] sm:$0xff] %vm541, %v421
  %557 = vst.msk [vmem:[%s5 + $0x78] sm:$0xff] %vm541, %v428
  %558 = vst.msk [vmem:[%s5 + $0x80] sm:$0xff] %vm541, %v435
  %559 = vst.msk [vmem:[%s5 + $0x88] sm:$0xff] %vm541, %v442
  %560 = vst.msk [vmem:[%s5 + $0x90] sm:$0xff] %vm541, %v449
  %561 = vst.msk [vmem:[%s5 + $0x98] sm:$0xff] %vm541, %v456
  %562 = vst.msk [vmem:[%s5 + $0xa0] sm:$0xff] %vm541, %v463
  %563 = vst.msk [vmem:[%s5 + $0xa8] sm:$0xff] %vm541, %v470
  %564 = vst.msk [vmem:[%s5 + $0xb0] sm:$0xff] %vm541, %v477
  %565 = vst.msk [vmem:[%s5 + $0xb8] sm:$0xff] %vm541, %v484
  %566 = vst.msk [vmem:[%s5 + $0xc0] sm:$0xff] %vm541, %v491
  %567 = vst.msk [vmem:[%s5 + $0xc8] sm:$0xff] %vm541, %v498
  %568 = vst.msk [vmem:[%s5 + $0xd0] sm:$0xff] %vm541, %v505
  %569 = vst.msk [vmem:[%s5 + $0xd8] sm:$0xff] %vm541, %v512
  %570 = vst.msk [vmem:[%s5 + $0xe0] sm:$0xff] %vm541, %v519
  %571 = vst.msk [vmem:[%s5 + $0xe8] sm:$0xff] %vm541, %v526
  %572 = vst.msk [vmem:[%s5 + $0xf0] sm:$0xff] %vm541, %v533
  %573 = vst.msk [vmem:[%s5 + $0xf8] sm:$0xff] %vm541, %v540
  // Predicated region
  $region17: #{tpu_custom_call.1} parent=0 // pred_check
    _
  $region18: #{tpu_custom_call.1} parent=0 // pred_check_branch
    %575 = sbr.rel (0) target = $region20
  $region19: #{tpu_custom_call.1} parent=0 // pred_region
    _
  $region20: #{tpu_custom_call.1} parent=0 // pred_fallthru
    _
  // Predicated region
  $region21: #{tpu_custom_call.1} parent=0 // pred_check
    _
  $region22: #{tpu_custom_call.1} parent=0 // pred_check_branch
    %577 = sbr.rel (0) target = $region24
  $region23: #{tpu_custom_call.1} parent=0 // pred_region
    _
  $region24: #{tpu_custom_call.1} parent=0 // pred_fallthru
    _

</llo_original>
